<compile_context>
chip_gen: v6e
topology: v6e:2x2x1
jax: 0.10.0
libtpu: 0.0.40
codegen_flags: <defaults>
</compile_context>

<pallas_src>
import functools

import jax
import jax.numpy as jnp
from jax import lax
from jax.experimental import pallas as pl
from jax.experimental.pallas import tpu as pltpu

BF16 = jnp.bfloat16
F32 = jnp.float32
LN_EPS = 1e-6


# --------------------------------------------------------------------------
# generation-aware configuration
# --------------------------------------------------------------------------
def _tpu_config():
    try:
        vmem = int(pltpu.get_tpu_info().vmem_capacity_bytes)
    except Exception:
        return 32 * 1024 * 1024, 128          # conservative default
    if vmem >= 100 * 1024 * 1024:              # v5e / v6e: 128 MiB physical VMEM
        return 96 * 1024 * 1024, 256
    return 40 * 1024 * 1024, 128               # v7x: 64 MiB physical VMEM


VMEM_LIMIT, TILE_CAP = _tpu_config()


def _pick_tile(M, cap):
    assert M % 8 == 0, f"row count {M} must be a multiple of 8"
    cands = [t for t in (512, 256, 128, 64, 32, 16, 8) if t <= cap and M % t == 0]
    # prefer an even number of >= 2 grid steps (balanced megacore split on v7x)
    for t in cands:
        steps = M // t
        if steps >= 2 and steps % 2 == 0:
            return t
    for t in cands:
        if M // t >= 2:
            return t
    return cands[0]


def _rep(shape):
    n = len(shape)
    return pl.BlockSpec(shape, lambda i, n=n: (0,) * n)


def _compiler_params():
    return pltpu.CompilerParams(dimension_semantics=("parallel",),
                                vmem_limit_bytes=VMEM_LIMIT)


def _mpnn_cost(M, K, H, Hff, n_tables, nb_depth, Lpad):
    flops = 2 * M * K * M * H * n_tables           # in-kernel one-hot gathers
    flops += 2 * M * H * H                         # W1 self channel
    flops += 2 * M * K * nb_depth * H * H          # fused W1 neighbour contraction
    flops += 2 * M * K * H * H                     # W2
    flops += 2 * M * H * H                         # W3 (after K-sum hoist)
    flops += 2 * M * H * Hff * 2                   # FFN
    flops += 2 * M * H * Lpad                      # fused output head
    transcendentals = 2 * M + M * Lpad             # LN rsqrt + head exp
    bytes_accessed = (2 * M * H * (2 + n_tables)   # h_V in/out + resident tables
                      + 2 * M * K * H              # h_E
                      + 4 * M * K * 3 + 4 * M      # idx + masks
                      + 2 * H * H * (3 + nb_depth) + 4 * H * Hff
                      + 2 * H * Lpad + 4 * M * Lpad)
    return pl.CostEstimate(flops=int(flops), transcendentals=int(transcendentals),
                           bytes_accessed=int(bytes_accessed))


# --------------------------------------------------------------------------
# fused (embedding linear -> LayerNorm -> projection) kernel
# --------------------------------------------------------------------------
def _embed_kernel(x_ref, w1_ref, b1_ref, g_ref, bt_ref, w2_ref, b2_ref, o_ref):
    x = x_ref[...].astype(BF16)
    h = jnp.dot(x, w1_ref[...], preferred_element_type=F32) + b1_ref[...]
    mu = jnp.mean(h, axis=-1, keepdims=True)
    var = jnp.mean((h - mu) ** 2, axis=-1, keepdims=True)
    h = (h - mu) * lax.rsqrt(var + LN_EPS) * g_ref[...] + bt_ref[...]
    y = jnp.dot(h.astype(BF16), w2_ref[...], preferred_element_type=F32) + b2_ref[...]
    o_ref[...] = y.astype(o_ref.dtype)


@functools.lru_cache(maxsize=None)
def _embed_call(M, Fin, Fmid, Fout, tile):
    call = pl.pallas_call(
        _embed_kernel,
        out_shape=jax.ShapeDtypeStruct((M, Fout), BF16),
        grid=(M // tile,),
        in_specs=[pl.BlockSpec((tile, Fin), lambda i: (i, 0)),
                  _rep((Fin, Fmid)), _rep((1, Fmid)), _rep((1, Fmid)), _rep((1, Fmid)),
                  _rep((Fmid, Fout)), _rep((1, Fout))],
        out_specs=pl.BlockSpec((tile, Fout), lambda i: (i, 0)),
        compiler_params=_compiler_params(),
    )
    return jax.jit(call)


def pallas_embed(x, w1, b1, g, bt, w2, b2):
    M, Fin = x.shape
    Fmid, Fout = w1.shape[1], w2.shape[1]
    tile = _pick_tile(M, cap=TILE_CAP)
    return _embed_call(M, Fin, Fmid, Fout, tile)(x, w1, b1, g, bt, w2, b2)


# --------------------------------------------------------------------------
# shared MPNN node-update epilogue (residual + LN + FFN + residual + LN + mask)
# --------------------------------------------------------------------------
def _node_update(hv_f32, dh, ln1g, ln1b, wf1, bf1, wf2, bf2, ln2g, ln2b, maskv):
    x = hv_f32 + dh
    mu = jnp.mean(x, axis=-1, keepdims=True)
    var = jnp.mean((x - mu) ** 2, axis=-1, keepdims=True)
    x = (x - mu) * lax.rsqrt(var + LN_EPS) * ln1g + ln1b

    ff = jnp.maximum(jnp.dot(x.astype(BF16), wf1, preferred_element_type=F32) + bf1, 0.0)
    ff = jnp.dot(ff.astype(BF16), wf2, preferred_element_type=F32) + bf2

    y = x + ff
    mu = jnp.mean(y, axis=-1, keepdims=True)
    var = jnp.mean((y - mu) ** 2, axis=-1, keepdims=True)
    y = (y - mu) * lax.rsqrt(var + LN_EPS) * ln2g + ln2b
    return y * maskv


# --------------------------------------------------------------------------
# encoder MPNN layer kernel (in-kernel gather + fused 2H W1 contraction)
# --------------------------------------------------------------------------
def _enc_mpnn_kernel(hv_ref, he_ref, idx_ref, tbl_ref, maskv_ref, att_ref,
                     w1s_ref, w1nb_ref, b1_ref, w2_ref, b2_ref, w3_ref, b3_ref,
                     ln1g_ref, ln1b_ref, wf1_ref, bf1_ref, wf2_ref, bf2_ref,
                     ln2g_ref, ln2b_ref, o_ref):
    hv = hv_ref[...]                       # (T, H)   bf16
    he = he_ref[...]                       # (TK, H)  bf16
    T, H = hv.shape
    TK = he.shape[0]
    K = TK // T
    Mtab = tbl_ref.shape[0]

    # in-kernel neighbour gather via exact one-hot MXU matmul
    onehot = (idx_ref[...] ==
              lax.broadcasted_iota(jnp.int32, (TK, Mtab), 1)).astype(BF16)
    g = jnp.dot(onehot, tbl_ref[...], preferred_element_type=F32).astype(BF16)

    # fused 2H-deep contraction for the [h_E | gather(h_V)] channels
    ev = jnp.concatenate([he, g], axis=-1)                              # (TK, 2H)
    nb_pre = jnp.dot(ev, w1nb_ref[...], preferred_element_type=F32)     # (TK, H)
    self_part = jnp.dot(hv, w1s_ref[...], preferred_element_type=F32) + b1_ref[...]

    pre = nb_pre.reshape(T, K, H) + self_part[:, None, :]
    h = jnp.maximum(pre, 0.0).astype(BF16).reshape(TK, H)
    h = jnp.maximum(jnp.dot(h, w2_ref[...], preferred_element_type=F32)
                    + b2_ref[...], 0.0)                                 # (TK, H) f32

    # K-sum hoisted ahead of W3: dh = (sum_k att*h) @ W3 + (sum_k att)*b3
    att = att_ref[...]                                # (TK,1) = mask_attend / 30
    att3 = att.reshape(T, K, 1)
    s = jnp.sum(h.reshape(T, K, H) * att3, axis=1)                      # (T, H)
    att_sum = jnp.sum(att3, axis=1)                                     # (T, 1)
    dh = jnp.dot(s.astype(BF16), w3_ref[...],
                 preferred_element_type=F32) + att_sum * b3_ref[...]

    y = _node_update(hv.astype(F32), dh,
                     ln1g_ref[...], ln1b_ref[...],
                     wf1_ref[...], bf1_ref[...], wf2_ref[...], bf2_ref[...],
                     ln2g_ref[...], ln2b_ref[...], maskv_ref[...])
    o_ref[...] = y.astype(o_ref.dtype)


@functools.lru_cache(maxsize=None)
def _enc_call(M, K, H, Hff, tile):
    TK = tile * K
    call = pl.pallas_call(
        _enc_mpnn_kernel,
        out_shape=jax.ShapeDtypeStruct((M, H), BF16),
        grid=(M // tile,),
        in_specs=[
            pl.BlockSpec((tile, H), lambda i: (i, 0)),      # h_V tile
            pl.BlockSpec((TK, H), lambda i: (i, 0)),        # h_E (flat rows)
            pl.BlockSpec((TK, 1), lambda i: (i, 0)),        # global neighbour idx
            _rep((M, H)),                                   # full h_V table (VMEM resident)
            pl.BlockSpec((tile, 1), lambda i: (i, 0)),      # mask_V
            pl.BlockSpec((TK, 1), lambda i: (i, 0)),        # mask_attend / 30
            _rep((H, H)), _rep((2 * H, H)), _rep((1, H)),
            _rep((H, H)), _rep((1, H)), _rep((H, H)), _rep((1, H)),
            _rep((1, H)), _rep((1, H)),
            _rep((H, Hff)), _rep((1, Hff)), _rep((Hff, H)), _rep((1, H)),
            _rep((1, H)), _rep((1, H)),
        ],
        out_specs=pl.BlockSpec((tile, H), lambda i: (i, 0)),
        compiler_params=_compiler_params(),
        cost_estimate=_mpnn_cost(M, K, H, Hff, 1, 2, 0),
    )
    return jax.jit(call)


def mpnn_encoder_layer(lp, hV, hE2, e_idx_flat, maskV2, att_flat):
    M, H = hV.shape
    K = hE2.shape[0] // M
    Hff = lp["Wf1"].shape[1]
    tile = _pick_tile(M, cap=TILE_CAP)
    call = _enc_call(M, K, H, Hff, tile)
    return call(hV, hE2, e_idx_flat, hV, maskV2, att_flat,
                lp["W1s"], lp["W1nb"], lp["b1"], lp["W2"], lp["b2"],
                lp["W3"], lp["b3"], lp["ln1_g"], lp["ln1_b"],
                lp["Wf1"], lp["bf1"], lp["Wf2"], lp["bf2"],
                lp["ln2_g"], lp["ln2_b"])


# --------------------------------------------------------------------------
# decoder MPNN layer kernel (in-kernel gathers, bf16 bw/fw blend, fused 3H W1,
# optional fused W_out + log-softmax head)
# --------------------------------------------------------------------------
def _make_dec_mpnn_kernel(with_head):
    def kernel(hv_ref, he_ref, idx_ref, tblS_ref, tblVe_ref, tblVc_ref,
               maskv_ref, maskbw_ref, maskfw_ref,
               w1s_ref, w1nb_ref, b1_ref, w2_ref, b2_ref, w3_ref, b3_ref,
               ln1g_ref, ln1b_ref, wf1_ref, bf1_ref, wf2_ref, bf2_ref,
               ln2g_ref, ln2b_ref, *rest):
        if with_head:
            wout_ref, bout_ref, o_ref, logp_ref = rest
        else:
            (o_ref,) = rest

        hv = hv_ref[...]
        he = he_ref[...]
        T, H = hv.shape
        TK = he.shape[0]
        K = TK // T
        Mtab = tblS_ref.shape[0]

        onehot = (idx_ref[...] ==
                  lax.broadcasted_iota(jnp.int32, (TK, Mtab), 1)).astype(BF16)
        gS = jnp.dot(onehot, tblS_ref[...], preferred_element_type=F32).astype(BF16)
        gVe = jnp.dot(onehot, tblVe_ref[...], preferred_element_type=F32).astype(BF16)
        gVc = jnp.dot(onehot, tblVc_ref[...], preferred_element_type=F32).astype(BF16)

        # mask_bw / mask_fw blend in bf16 (0/1 masks -> exact)
        mbw = maskbw_ref[...].astype(BF16)             # (TK,1)
        mfw = maskfw_ref[...].astype(BF16)
        e_ch = he * (mbw + mfw)                        # h_E * mask_1D
        s_ch = gS * mbw                                # encoder S stream is zero
        v_ch = gVc * mbw + gVe * mfw
        esv = jnp.concatenate([e_ch, s_ch, v_ch], axis=-1)                  # (TK,3H)

        nb_pre = jnp.dot(esv, w1nb_ref[...], preferred_element_type=F32)
        self_part = jnp.dot(hv, w1s_ref[...], preferred_element_type=F32) + b1_ref[...]

        pre = nb_pre.reshape(T, K, H) + self_part[:, None, :]
        h = jnp.maximum(pre, 0.0).astype(BF16).reshape(TK, H)
        h = jnp.maximum(jnp.dot(h, w2_ref[...], preferred_element_type=F32)
                        + b2_ref[...], 0.0)

        # K-sum hoisted ahead of W3; 1/30 message scale folded in
        s = jnp.sum(h.reshape(T, K, H), axis=1) * (1.0 / 30.0)
        dh = jnp.dot(s.astype(BF16), w3_ref[...],
                     preferred_element_type=F32) + (K / 30.0) * b3_ref[...]

        y = _node_update(hv.astype(F32), dh,
                         ln1g_ref[...], ln1b_ref[...],
                         wf1_ref[...], bf1_ref[...], wf2_ref[...], bf2_ref[...],
                         ln2g_ref[...], ln2b_ref[...], maskv_ref[...])
        o_ref[...] = y.astype(o_ref.dtype)

        if with_head:
            logits = jnp.dot(y.astype(BF16), wout_ref[...],
                             preferred_element_type=F32) + bout_ref[...]
            m = jnp.max(logits, axis=-1, keepdims=True)
            z = logits - m
            lse = jnp.log(jnp.sum(jnp.exp(z), axis=-1, keepdims=True))
            logp_ref[...] = z - lse

    return kernel


@functools.lru_cache(maxsize=None)
def _dec_call(M, K, H, Hff, Lpad, tile):
    TK = tile * K
    in_specs = [
        pl.BlockSpec((tile, H), lambda i: (i, 0)),          # h_V tile
        pl.BlockSpec((TK, H), lambda i: (i, 0)),            # h_E (flat rows)
        pl.BlockSpec((TK, 1), lambda i: (i, 0)),            # global neighbour idx
        _rep((M, H)), _rep((M, H)), _rep((M, H)),           # h_S / h_V_enc / h_V_cur tables
        pl.BlockSpec((tile, 1), lambda i: (i, 0)),          # mask_V
        pl.BlockSpec((TK, 1), lambda i: (i, 0)),            # mask_bw (flat)
        pl.BlockSpec((TK, 1), lambda i: (i, 0)),            # mask_fw (flat)
        _rep((H, H)), _rep((3 * H, H)), _rep((1, H)),
        _rep((H, H)), _rep((1, H)), _rep((H, H)), _rep((1, H)),
        _rep((1, H)), _rep((1, H)),
        _rep((H, Hff)), _rep((1, Hff)), _rep((Hff, H)), _rep((1, H)),
        _rep((1, H)), _rep((1, H)),
    ]
    if Lpad > 0:
        in_specs += [_rep((H, Lpad)), _rep((1, Lpad))]
        out_shape = (jax.ShapeDtypeStruct((M, H), BF16),
                     jax.ShapeDtypeStruct((M, Lpad), F32))
        out_specs = (pl.BlockSpec((tile, H), lambda i: (i, 0)),
                     pl.BlockSpec((tile, Lpad), lambda i: (i, 0)))
    else:
        out_shape = jax.ShapeDtypeStruct((M, H), BF16)
        out_specs = pl.BlockSpec((tile, H), lambda i: (i, 0))

    call = pl.pallas_call(
        _make_dec_mpnn_kernel(with_head=(Lpad > 0)),
        out_shape=out_shape,
        grid=(M // tile,),
        in_specs=in_specs,
        out_specs=out_specs,
        compiler_params=_compiler_params(),
        cost_estimate=_mpnn_cost(M, K, H, Hff, 3, 3, Lpad),
    )
    return jax.jit(call)


def mpnn_decoder_layer(lp, hV, hE2, e_idx_flat, hS_tbl, hVenc_tbl,
                       maskV2, mask_bw_flat, mask_fw_flat, head=None):
    M, H = hV.shape
    K = hE2.shape[0] // M
    Hff = lp["Wf1"].shape[1]
    tile = _pick_tile(M, cap=TILE_CAP)
    Lpad = head[0].shape[1] if head is not None else 0
    call = _dec_call(M, K, H, Hff, Lpad, tile)
    args = [hV, hE2, e_idx_flat, hS_tbl, hVenc_tbl, hV,
            maskV2, mask_bw_flat, mask_fw_flat,
            lp["W1s"], lp["W1nb"], lp["b1"], lp["W2"], lp["b2"],
            lp["W3"], lp["b3"], lp["ln1_g"], lp["ln1_b"],
            lp["Wf1"], lp["bf1"], lp["Wf2"], lp["bf2"],
            lp["ln2_g"], lp["ln2_b"]]
    if head is not None:
        args += [head[0], head[1]]
    return call(*args)


# --------------------------------------------------------------------------
# plain-JAX glue (features, masks, tiny gathers)
# --------------------------------------------------------------------------
def gather_nodes(nodes, E_idx):
    # nodes (B,N,C), E_idx (B,N,K) -> (B,N,K,C)
    B, N, C = nodes.shape
    K = E_idx.shape[-1]
    idx = E_idx.reshape(B, N * K, 1)
    g = jnp.take_along_axis(nodes, jnp.broadcast_to(idx, (B, N * K, C)), axis=1)
    return g.reshape(B, N, K, C)


def _dihedrals(X, eps=1e-7):
    # X: (B, N, 4, 3); uses N, CA, C backbone atoms
    B, N = X.shape[0], X.shape[1]
    Xb = X[:, :, :3, :].reshape(B, 3 * N, 3)
    dX = Xb[:, 1:, :] - Xb[:, :-1, :]
    U = dX / (jnp.linalg.norm(dX, axis=-1, keepdims=True) + eps)
    u2, u1, u0 = U[:, :-2, :], U[:, 1:-1, :], U[:, 2:, :]
    n2 = jnp.cross(u2, u1)
    n2 = n2 / (jnp.linalg.norm(n2, axis=-1, keepdims=True) + eps)
    n1 = jnp.cross(u1, u0)
    n1 = n1 / (jnp.linalg.norm(n1, axis=-1, keepdims=True) + eps)
    cosD = jnp.clip(jnp.sum(n2 * n1, axis=-1), -1 + eps, 1 - eps)
    D = jnp.sign(jnp.sum(u2 * n1, axis=-1)) * jnp.arccos(cosD)
    D = jnp.pad(D, ((0, 0), (1, 2)))
    D = D.reshape(B, N, 3)
    return jnp.concatenate([jnp.cos(D), jnp.sin(D)], axis=-1)   # (B, N, 6)


def protein_feature_tensors(params, X, mask, chain_encoding_all):
    # TODO(synk): simplified shape-faithful ProteinFeatures (class body not in snippet).
    B, N = X.shape[0], X.shape[1]
    K = params["k"]
    Ca = X[:, :, 1, :]
    mask_2D = mask[:, None, :] * mask[:, :, None]
    dX = Ca[:, :, None, :] - Ca[:, None, :, :]
    D = jnp.sqrt(jnp.sum(dX ** 2, axis=-1) + 1e-6)
    D_max = jnp.max(D, axis=(1, 2), keepdims=True)
    D_adjust = D + (1.0 - mask_2D) * D_max
    neg_vals, E_idx = lax.top_k(-D_adjust, K)           # (B,N,K)
    D_neighbors = -neg_vals

    # RBF (16)
    D_mu = jnp.linspace(2.0, 22.0, 16)
    D_sigma = (22.0 - 2.0) / 16.0
    RBF = jnp.exp(-(((D_neighbors[..., None] - D_mu) / D_sigma) ** 2))   # (B,N,K,16)

    # relative positional encoding (16), gated by same-chain indicator
    offset = (E_idx - jnp.arange(N)[None, :, None]).astype(F32)
    ce_nb = jnp.take_along_axis(chain_encoding_all, E_idx.reshape(B, -1),
                                axis=1).reshape(B, N, K)
    same_chain = (ce_nb == chain_encoding_all[:, :, None]).astype(F32)
    d = offset * same_chain
    freqs = jnp.exp(jnp.arange(0, 16, 2, dtype=F32) * (-jnp.log(10000.0) / 16.0))
    ang = d[..., None] * freqs
    PE = jnp.concatenate([jnp.cos(ang), jnp.sin(ang)], axis=-1)          # (B,N,K,16)

    E_raw = jnp.concatenate([PE, RBF], axis=-1)                          # (B,N,K,32)
    V_raw = _dihedrals(X)                                                # (B,N,6)
    return V_raw, E_raw, E_idx


# --------------------------------------------------------------------------
# full forward (DECODING_ORDER == 'forward')
# --------------------------------------------------------------------------
def struct2seq_forward(params, X, S, L, mask, chain_encoding_all, chain_M, randn, tied_pos):
    # TODO(synk): DECODING_ORDER == 'random' tied-position branch (data-dependent
    #             Python loop over tied_pos) is not translated; L/chain_M/randn unused here.
    del L, chain_M, randn, tied_pos
    B, N = X.shape[0], X.shape[1]
    H = params["hidden_dim"]
    K = params["k"]
    M = B * N

    V_raw, E_raw, E_idx = protein_feature_tensors(params, X, mask, chain_encoding_all)

    # fused (feature-embedding linear -> LayerNorm -> W_v / W_e)
    hV = pallas_embed(V_raw.reshape(M, -1),
                      params["node_emb_w"], params["node_emb_b"],
                      params["norm_nodes_g"], params["norm_nodes_b"],
                      params["W_v_w"], params["W_v_b"])                  # (M, H) bf16
    hE2 = pallas_embed(E_raw.reshape(M * K, -1),
                       params["edge_emb_w"], params["edge_emb_b"],
                       params["norm_edges_g"], params["norm_edges_b"],
                       params["W_e_w"], params["W_e_b"])                 # (M*K, H) bf16

    # global flat neighbour indices, shared by every layer's in-kernel gather
    offsets = (jnp.arange(B, dtype=jnp.int32) * N)[:, None, None]
    e_idx_flat = (E_idx.astype(jnp.int32) + offsets).reshape(M * K, 1)

    mask_nb = gather_nodes(mask[..., None], E_idx)[..., 0]
    mask_attend = mask[..., None] * mask_nb                              # (B,N,K)
    att_flat = (mask_attend * (1.0 / 30.0)).reshape(M * K, 1).astype(F32)
    maskV2 = mask.reshape(M, 1).astype(F32)

    # encoder: neighbour gathers done in-kernel from the VMEM-resident h_V table
    for lp in params["encoder_layers"]:
        hV = mpnn_encoder_layer(lp, hV, hE2, e_idx_flat, maskV2, att_flat)

    # decoder constant streams: sequence table and encoder-output table (no pre-gather)
    hS_tbl = jnp.take(params["W_s"], S, axis=0).reshape(M, H)            # (M,H) bf16
    hVenc_tbl = hV

    ii = jnp.arange(N)[None, :, None]
    autoreg = (E_idx - ii < 0).astype(F32)                               # forward decoding order
    mask_bw_flat = (mask[:, :, None] * autoreg).reshape(M * K, 1).astype(F32)
    mask_fw_flat = (mask[:, :, None] * (1.0 - autoreg)).reshape(M * K, 1).astype(F32)

    n_dec = len(params["decoder_layers"])
    log_probs = None
    for li, lp in enumerate(params["decoder_layers"]):
        head = ((params["W_out_w"], params["W_out_b"])
                if li == n_dec - 1 else None)
        res = mpnn_decoder_layer(lp, hV, hE2, e_idx_flat, hS_tbl, hVenc_tbl,
                                 maskV2, mask_bw_flat, mask_fw_flat, head=head)
        if head is None:
            hV = res
        else:
            hV, log_probs = res

    # padded logits carry a -1e9 bias -> log-softmax over the first num_letters is exact
    return log_probs.reshape(B, N, -1)[:, :, :params["num_letters"]]


# --------------------------------------------------------------------------
# pure-JAX f32 reference (same weights) for a tolerance check
# --------------------------------------------------------------------------
def _ln_ref(x, g, b):
    mu = jnp.mean(x, axis=-1, keepdims=True)
    var = jnp.mean((x - mu) ** 2, axis=-1, keepdims=True)
    return (x - mu) * lax.rsqrt(var + LN_EPS) * g + b


def struct2seq_reference(params, X, S, mask, chain_encoding_all):
    B, N = X.shape[0], X.shape[1]
    H = params["hidden_dim"]
    f = lambda w: w.astype(F32)

    V_raw, E_raw, E_idx = protein_feature_tensors(params, X, mask, chain_encoding_all)

    def emb(x, w1, b1, g, bt, w2, b2):
        h = _ln_ref(x @ f(w1) + b1, g, bt)
        return h @ f(w2) + b2

    h_V = emb(V_raw, params["node_emb_w"], params["node_emb_b"],
              params["norm_nodes_g"], params["norm_nodes_b"],
              params["W_v_w"], params["W_v_b"])                      # (B,N,H)
    h_E = emb(E_raw, params["edge_emb_w"], params["edge_emb_b"],
              params["norm_edges_g"], params["norm_edges_b"],
              params["W_e_w"], params["W_e_b"])                      # (B,N,K,H)

    mask_nb = gather_nodes(mask[..., None], E_idx)[..., 0]
    mask_attend = mask[..., None] * mask_nb

    def mpnn_ref(lp, h_V, h_in, mask_V, m_att=None):
        W1 = jnp.concatenate([f(lp["W1s"]), f(lp["W1nb"])], axis=0)
        h_V_exp = jnp.broadcast_to(h_V[:, :, None, :], h_in.shape[:3] + (H,))
        h_EV = jnp.concatenate([h_V_exp, h_in], axis=-1)
        h = jnp.maximum(h_EV @ W1 + lp["b1"], 0.0)
        h = jnp.maximum(h @ f(lp["W2"]) + lp["b2"], 0.0)
        h = h @ f(lp["W3"]) + lp["b3"]
        if m_att is not None:
            h = h * m_att[..., None]
        dh = jnp.sum(h, axis=-2) / 30.0
        x = _ln_ref(h_V + dh, lp["ln1_g"], lp["ln1_b"])
        ff = jnp.maximum(x @ f(lp["Wf1"]) + lp["bf1"], 0.0) @ f(lp["Wf2"]) + lp["bf2"]
        x = _ln_ref(x + ff, lp["ln2_g"], lp["ln2_b"])
        return x * mask_V[..., None]

    for lp in params["encoder_layers"]:
        h_in = jnp.concatenate([h_E, gather_nodes(h_V, E_idx)], axis=-1)
        h_V = mpnn_ref(lp, h_V, h_in, mask, mask_attend)

    h_S = jnp.take(f(params["W_s"]), S, axis=0)
    h_ES = jnp.concatenate([h_E, gather_nodes(h_S, E_idx)], axis=-1)
    h_ESV_enc = jnp.concatenate([h_E, jnp.zeros_like(h_E), gather_nodes(h_V, E_idx)],
                                axis=-1)

    ii = jnp.arange(N)[None, :, None]
    autoreg = (E_idx - ii < 0).astype(F32)
    mask_bw = (mask[:, :, None] * autoreg)[..., None]
    mask_fw = (mask[:, :, None] * (1.0 - autoreg))[..., None]
    h_enc_fw = mask_fw * h_ESV_enc

    for lp in params["decoder_layers"]:
        h_ESV = jnp.concatenate([h_ES, gather_nodes(h_V, E_idx)], axis=-1)
        h_ESV = mask_bw * h_ESV + h_enc_fw
        h_V = mpnn_ref(lp, h_V, h_ESV, mask)

    logits = h_V @ f(params["W_out_w"]) + params["W_out_b"]
    logits = logits[..., :params["num_letters"]]
    return jax.nn.log_softmax(logits, axis=-1)


# --------------------------------------------------------------------------
# deterministic parameter construction
# --------------------------------------------------------------------------
def _xavier(key, shape):
    limit = (6.0 / (shape[0] + shape[1])) ** 0.5
    return jax.random.uniform(key, shape, F32, -limit, limit)


def _init_layer(key, H, nb_depth):
    ks = jax.random.split(key, 6)
    return dict(
        W1s=_xavier(ks[0], (H, H)).astype(BF16),
        W1nb=_xavier(ks[1], (nb_depth * H, H)).astype(BF16),
        b1=jnp.zeros((1, H), F32),
        W2=_xavier(ks[2], (H, H)).astype(BF16), b2=jnp.zeros((1, H), F32),
        W3=_xavier(ks[3], (H, H)).astype(BF16), b3=jnp.zeros((1, H), F32),
        ln1_g=jnp.ones((1, H), F32), ln1_b=jnp.zeros((1, H), F32),
        Wf1=_xavier(ks[4], (H, 4 * H)).astype(BF16), bf1=jnp.zeros((1, 4 * H), F32),
        Wf2=_xavier(ks[5], (4 * H, H)).astype(BF16), bf2=jnp.zeros((1, H), F32),
        ln2_g=jnp.ones((1, H), F32), ln2_b=jnp.zeros((1, H), F32),
    )


def init_params(key, *, num_letters, node_features, edge_features, hidden_dim,
                num_encoder_layers, num_decoder_layers, vocab, k_neighbors):
    ks = jax.random.split(key, 8 + num_encoder_layers + num_decoder_layers)
    H = hidden_dim
    lpad = ((num_letters + 127) // 128) * 128           # lane-dense out head
    wout = _xavier(ks[5], (H, num_letters))
    W_out_w = jnp.zeros((H, lpad), F32).at[:, :num_letters].set(wout).astype(BF16)
    W_out_b = jnp.full((1, lpad), -1e9, F32).at[0, :num_letters].set(0.0)
    return dict(
        hidden_dim=H, k=k_neighbors, num_letters=num_letters,
        node_emb_w=_xavier(ks[0], (6, node_features)).astype(BF16),
        node_emb_b=jnp.zeros((1, node_features), F32),
        norm_nodes_g=jnp.ones((1, node_features), F32),
        norm_nodes_b=jnp.zeros((1, node_features), F32),
        edge_emb_w=_xavier(ks[1], (32, edge_features)).astype(BF16),
        edge_emb_b=jnp.zeros((1, edge_features), F32),
        norm_edges_g=jnp.ones((1, edge_features), F32),
        norm_edges_b=jnp.zeros((1, edge_features), F32),
        W_v_w=_xavier(ks[2], (node_features, H)).astype(BF16),
        W_v_b=jnp.zeros((1, H), F32),
        W_e_w=_xavier(ks[3], (edge_features, H)).astype(BF16),
        W_e_b=jnp.zeros((1, H), F32),
        W_s=_xavier(ks[4], (vocab, H)).astype(BF16),
        W_out_w=W_out_w,
        W_out_b=W_out_b,
        encoder_layers=[_init_layer(ks[8 + i], H, 2) for i in range(num_encoder_layers)],
        decoder_layers=[_init_layer(ks[8 + num_encoder_layers + i], H, 3)
                        for i in range(num_decoder_layers)],
    )


# --------------------------------------------------------------------------
# main
# --------------------------------------------------------------------------
if __name__ == "__main__":
    # small but lane/sublane-friendly demo shapes (H=128 lane-dense, K=8 aligned)
    B, N, K = 2, 16, 8
    H = 128
    node_features = 128
    edge_features = 128
    num_letters = 21
    vocab = 21

    key = jax.random.PRNGKey(0)
    kp, kx, ks, kr = jax.random.split(key, 4)

    params = init_params(kp, num_letters=num_letters, node_features=node_features,
                         edge_features=edge_features, hidden_dim=H,
                         num_encoder_layers=3, num_decoder_layers=3,
                         vocab=vocab, k_neighbors=K)

    X = jax.random.normal(kx, (B, N, 4, 3), F32) * 3.0       # backbone coords (N,CA,C,O)
    S = jax.random.randint(ks, (B, N), 0, vocab)
    L = jnp.full((B,), N, jnp.int32)
    mask = jnp.ones((B, N), F32)
    chain_encoding_all = jnp.concatenate(
        [jnp.ones((B, N // 2)), 2.0 * jnp.ones((B, N - N // 2))], axis=1).astype(F32)
    chain_M = jnp.ones((B, N), F32)
    randn = jax.random.normal(kr, (B, N), F32)
    tied_pos = []   # unused for DECODING_ORDER == 'forward'

    log_probs = struct2seq_forward(params, X, S, L, mask, chain_encoding_all,
                                   chain_M, randn, tied_pos)
    jax.block_until_ready(log_probs)

    assert log_probs.shape == (B, N, num_letters)
    assert bool(jnp.all(jnp.isfinite(log_probs)))
    # rows of log-softmax must sum to ~1 in prob space
    assert bool(jnp.allclose(jnp.sum(jnp.exp(log_probs), axis=-1), 1.0, atol=1e-4))

    # pure-JAX f32 reference check (bf16 activations in the kernel -> loose tolerance)
    log_probs_ref = struct2seq_reference(params, X, S, mask, chain_encoding_all)
    max_err = float(jnp.max(jnp.abs(log_probs.astype(F32) - log_probs_ref)))
    assert max_err < 0.5, f"reference mismatch: max abs err {max_err}"

    print("KERNEL_OK")
</pallas_src>

<mosaic_0001>
module attributes {stable_mosaic.version = 11 : i64} {
  func.func @_embed_kernel(%arg0: i32, %arg1: memref<16x6xf32, #tpu.memory_space<vmem>>, %arg2: memref<6x128xbf16, #tpu.memory_space<vmem>>, %arg3: memref<1x128xf32, #tpu.memory_space<vmem>>, %arg4: memref<1x128xf32, #tpu.memory_space<vmem>>, %arg5: memref<1x128xf32, #tpu.memory_space<vmem>>, %arg6: memref<128x128xbf16, #tpu.memory_space<vmem>>, %arg7: memref<1x128xf32, #tpu.memory_space<vmem>>, %arg8: memref<16x128xbf16, #tpu.memory_space<vmem>>) attributes {dimension_semantics = [#tpu.dimension_semantics<parallel>], iteration_bounds = array<i64: 2>, scalar_prefetch = 0 : i64, scratch_operands = 0 : i64, tpu.core_type = #tpu.core_type<tc>, window_params = [{transform_indices = @transform_0, window_bounds = array<i64: 16, 6>}, {pipeline_mode = #tpu.pipeline_mode<synchronous>, transform_indices = @transform_1, window_bounds = array<i64: 6, 128>}, {pipeline_mode = #tpu.pipeline_mode<synchronous>, transform_indices = @transform_2, window_bounds = array<i64: 1, 128>}, {pipeline_mode = #tpu.pipeline_mode<synchronous>, transform_indices = @transform_3, window_bounds = array<i64: 1, 128>}, {pipeline_mode = #tpu.pipeline_mode<synchronous>, transform_indices = @transform_4, window_bounds = array<i64: 1, 128>}, {pipeline_mode = #tpu.pipeline_mode<synchronous>, transform_indices = @transform_5, window_bounds = array<i64: 128, 128>}, {pipeline_mode = #tpu.pipeline_mode<synchronous>, transform_indices = @transform_6, window_bounds = array<i64: 1, 128>}, {transform_indices = @transform_7, window_bounds = array<i64: 16, 128>}]} {
    %c0 = arith.constant 0 : index
    %c0_0 = arith.constant 0 : index
    %0 = vector.load %arg1[%c0, %c0_0] : memref<16x6xf32, #tpu.memory_space<vmem>>, vector<16x6xf32>
    %1 = arith.truncf %0 : vector<16x6xf32> to vector<16x6xbf16>
    %c0_1 = arith.constant 0 : index
    %c0_2 = arith.constant 0 : index
    %2 = vector.load %arg2[%c0_1, %c0_2] : memref<6x128xbf16, #tpu.memory_space<vmem>>, vector<6x128xbf16>
    %cst = arith.constant dense<0.000000e+00> : vector<16x128xf32>
    %3 = tpu.matmul %1, %2, %cst {dimension_numbers = #tpu.dot_dimension_numbers<[1], [0], [0], [1], [0, 0, 1, 1], [], []>} : vector<16x6xbf16>, vector<6x128xbf16>, vector<16x128xf32> -> vector<16x128xf32>
    %c0_3 = arith.constant 0 : index
    %c0_4 = arith.constant 0 : index
    %4 = vector.load %arg3[%c0_3, %c0_4] : memref<1x128xf32, #tpu.memory_space<vmem>>, vector<1x128xf32>
    %5 = vector.broadcast %4 : vector<1x128xf32> to vector<16x128xf32>
    %6 = arith.addf %3, %5 : vector<16x128xf32>
    %cst_5 = arith.constant dense<0.000000e+00> : vector<16xf32>
    %7 = vector.multi_reduction <add>, %6, %cst_5 [1] : vector<16x128xf32> to vector<16xf32>
    %8 = vector.shape_cast %7 : vector<16xf32> to vector<16x1xf32>
    %cst_6 = arith.constant 1.280000e+02 : f32
    %9 = vector.broadcast %cst_6 : f32 to vector<16x1xf32>
    %10 = arith.divf %8, %9 : vector<16x1xf32>
    %11 = vector.broadcast %10 : vector<16x1xf32> to vector<16x128xf32>
    %12 = arith.subf %6, %11 : vector<16x128xf32>
    %13 = arith.mulf %12, %12 : vector<16x128xf32>
    %cst_7 = arith.constant dense<0.000000e+00> : vector<16xf32>
    %14 = vector.multi_reduction <add>, %13, %cst_7 [1] : vector<16x128xf32> to vector<16xf32>
    %15 = vector.shape_cast %14 : vector<16xf32> to vector<16x1xf32>
    %cst_8 = arith.constant 1.280000e+02 : f32
    %16 = vector.broadcast %cst_8 : f32 to vector<16x1xf32>
    %17 = arith.divf %15, %16 : vector<16x1xf32>
    %18 = vector.broadcast %10 : vector<16x1xf32> to vector<16x128xf32>
    %19 = arith.subf %6, %18 : vector<16x128xf32>
    %cst_9 = arith.constant 9.99999997E-7 : f32
    %20 = vector.broadcast %cst_9 : f32 to vector<16x1xf32>
    %21 = arith.addf %17, %20 : vector<16x1xf32>
    %22 = math.rsqrt %21 : vector<16x1xf32>
    %23 = vector.broadcast %22 : vector<16x1xf32> to vector<16x128xf32>
    %24 = arith.mulf %19, %23 : vector<16x128xf32>
    %c0_10 = arith.constant 0 : index
    %c0_11 = arith.constant 0 : index
    %25 = vector.load %arg4[%c0_10, %c0_11] : memref<1x128xf32, #tpu.memory_space<vmem>>, vector<1x128xf32>
    %26 = vector.broadcast %25 : vector<1x128xf32> to vector<16x128xf32>
    %27 = arith.mulf %24, %26 : vector<16x128xf32>
    %c0_12 = arith.constant 0 : index
    %c0_13 = arith.constant 0 : index
    %28 = vector.load %arg5[%c0_12, %c0_13] : memref<1x128xf32, #tpu.memory_space<vmem>>, vector<1x128xf32>
    %29 = vector.broadcast %28 : vector<1x128xf32> to vector<16x128xf32>
    %30 = arith.addf %27, %29 : vector<16x128xf32>
    %31 = arith.truncf %30 : vector<16x128xf32> to vector<16x128xbf16>
    %c0_14 = arith.constant 0 : index
    %c0_15 = arith.constant 0 : index
    %32 = vector.load %arg6[%c0_14, %c0_15] : memref<128x128xbf16, #tpu.memory_space<vmem>>, vector<128x128xbf16>
    %cst_16 = arith.constant dense<0.000000e+00> : vector<16x128xf32>
    %33 = tpu.matmul %31, %32, %cst_16 {dimension_numbers = #tpu.dot_dimension_numbers<[1], [0], [0], [1], [0, 0, 1, 1], [], []>} : vector<16x128xbf16>, vector<128x128xbf16>, vector<16x128xf32> -> vector<16x128xf32>
    %c0_17 = arith.constant 0 : index
    %c0_18 = arith.constant 0 : index
    %34 = vector.load %arg7[%c0_17, %c0_18] : memref<1x128xf32, #tpu.memory_space<vmem>>, vector<1x128xf32>
    %35 = vector.broadcast %34 : vector<1x128xf32> to vector<16x128xf32>
    %36 = arith.addf %33, %35 : vector<16x128xf32>
    %37 = arith.truncf %36 : vector<16x128xf32> to vector<16x128xbf16>
    %c0_19 = arith.constant 0 : index
    %c0_20 = arith.constant 0 : index
    %38 = vector.load %arg8[%c0_19, %c0_20] : memref<16x128xbf16, #tpu.memory_space<vmem>>, vector<16x128xbf16>
    tpu.vector_store %arg8[%c0_19, %c0_20], %37 {strides = array<i32>} : memref<16x128xbf16, #tpu.memory_space<vmem>>, vector<16x128xbf16>,
    return
  }
  func.func @transform_0(%arg0: i32) -> (i32, i32) {
    %c0_i32 = arith.constant 0 : i32
    %c0_i32_0 = arith.constant 0 : i32
    return %arg0, %c0_i32 : i32, i32
  }
  func.func @transform_1(%arg0: i32) -> (i32, i32) {
    %c0_i32 = arith.constant 0 : i32
    %c0_i32_0 = arith.constant 0 : i32
    %c0_i32_1 = arith.constant 0 : i32
    return %c0_i32, %c0_i32_0 : i32, i32
  }
  func.func @transform_2(%arg0: i32) -> (i32, i32) {
    %c0_i32 = arith.constant 0 : i32
    %c0_i32_0 = arith.constant 0 : i32
    %c0_i32_1 = arith.constant 0 : i32
    return %c0_i32, %c0_i32_0 : i32, i32
  }
  func.func @transform_3(%arg0: i32) -> (i32, i32) {
    %c0_i32 = arith.constant 0 : i32
    %c0_i32_0 = arith.constant 0 : i32
    %c0_i32_1 = arith.constant 0 : i32
    return %c0_i32, %c0_i32_0 : i32, i32
  }
  func.func @transform_4(%arg0: i32) -> (i32, i32) {
    %c0_i32 = arith.constant 0 : i32
    %c0_i32_0 = arith.constant 0 : i32
    %c0_i32_1 = arith.constant 0 : i32
    return %c0_i32, %c0_i32_0 : i32, i32
  }
  func.func @transform_5(%arg0: i32) -> (i32, i32) {
    %c0_i32 = arith.constant 0 : i32
    %c0_i32_0 = arith.constant 0 : i32
    %c0_i32_1 = arith.constant 0 : i32
    return %c0_i32, %c0_i32_0 : i32, i32
  }
  func.func @transform_6(%arg0: i32) -> (i32, i32) {
    %c0_i32 = arith.constant 0 : i32
    %c0_i32_0 = arith.constant 0 : i32
    %c0_i32_1 = arith.constant 0 : i32
    return %c0_i32, %c0_i32_0 : i32, i32
  }
  func.func @transform_7(%arg0: i32) -> (i32, i32) {
    %c0_i32 = arith.constant 0 : i32
    %c0_i32_0 = arith.constant 0 : i32
    return %arg0, %c0_i32 : i32, i32
  }
}

</mosaic_0001>

<llo_original>
// kernel: tpu_custom_call.1
$region0: #{tpu_custom_call.1}
  #allocation0 [shape = 'u32[]', space=smem, size = 0x4, offset = 0x4, fixed_abs, tag = 'smem constant byte address 0x4 - core index']
  #allocation1 [shape = 'u32[144,128]{1,0:T(1,128)}', space=vmem, size = 0x12000, scoped, tag = 'internal scratch']
  %s0 = inlined_call_operand.vmem [shape: f32[32,6], index: 0, kind: input, shape index: {}]
  %s1 = inlined_call_operand.vmem [shape: bf16[6,128], index: 1, kind: input, shape index: {}]
  %s2 = inlined_call_operand.vmem [shape: f32[1,128], index: 2, kind: input, shape index: {}]
  %s3 = inlined_call_operand.vmem [shape: f32[1,128], index: 3, kind: input, shape index: {}]
  %s4 = inlined_call_operand.vmem [shape: f32[1,128], index: 4, kind: input, shape index: {}]
  %s5 = inlined_call_operand.hbm [shape: bf16[128,128], index: 5, kind: input, shape index: {}]
  %s6 = inlined_call_operand.vmem [shape: f32[1,128], index: 6, kind: input, shape index: {}]
  %s7 = inlined_call_operand.hbm [shape: bf16[32,128], index: 7, kind: output, shape index: {}]
  %s8 = sld [smem:[#allocation0]]
  $region65: #{tpu_custom_call.1} parent=0
    _
  %s10 = ssub.s32 1, %s8
  %s11 = scalar_select 0, %s10, %s8
  $region1: #{tpu_custom_call.1} parent=0
    #allocation2 [shape = 'u8[32768]{0}', space=vmem, size = 0x8000, scoped, tag = 'input window, operand 5, single buffered']
    #allocation3 [shape = 's32[2]{0}', space=sflag, size = 0x8, scoped, tag = 'scoped memory for tpu_custom_call.1']
    #allocation4 [shape = 's32[2]{0}', space=sflag, size = 0x8, scoped, tag = 'scoped memory for tpu_custom_call.1']
    #allocation5 [shape = 'u8[8192]{0}', space=vmem, size = 0x2000, scoped, tag = 'output window, operand 0']
    %12 = vsyncpa [#allocation3], 0
    %13 = vsyncpa [#allocation4], 0
    %s14 = scalar_lea.sflag [#allocation4], 1
    %15 = vsyncpa %s14, 0
    loop: start=0, step=1, limit=4
    $region2: #{tpu_custom_call.1} parent=1 // loop_pre_header
      _
    $region3: #{tpu_custom_call.1} parent=1 // loop_header
      %s17 = sphi 0, %s21
      %p18 = scmp.ge.s32.totalorder %s17, 4
      %s27 = sphi 0, %s29
      %s30 = sphi 0, %s27
      %s31 = sphi 0, %s30
      %s47 = sphi 0, %s31
      %s51 = sphi 0, %s51
      %s53 = sphi 0, %s51
      %s54 = sphi 0, %s53
      %s68 = sphi 0, %s54
      %s72 = sphi 0, %s72
      %s74 = sphi 0, %s72
      %s75 = sphi 0, %s74
      %s89 = sphi 0, %s75
      %s93 = sphi 0, %s93
      %s95 = sphi 0, %s93
      %s96 = sphi 0, %s95
      %s110 = sphi 0, %s96
      %s114 = sphi 0, %s114
      %s116 = sphi 0, %s114
      %s117 = sphi 0, %s116
      %s131 = sphi 0, %s117
      %s135 = sphi 0, %s135
      %s137 = sphi 0, %s135
      %s138 = sphi 0, %s137
      %s152 = sphi 0, %s138
      %s156 = sphi 0, %s156
      %s158 = sphi 0, %s156
      %s159 = sphi 0, %s158
      %s173 = sphi 0, %s159
      %s179 = sphi 0, %s181
      %s182 = sphi 0, %s179
      %s183 = sphi 0, %s182
      %s199 = sphi 0, %s183
    $region4: #{tpu_custom_call.1} parent=1 // loop_header_branch
      %20 = sbr.rel (%p18) target = $region8
    $region5: #{tpu_custom_call.1} parent=1 // loop_body
      %s22 = ssub.s32 %s17, 1
      %s23 = ssub.s32 %s17, 2
      %s24 = sadd.s32 %s17, 1
      %s25 = ssub.s32 %s17, %s24
      %p26 = scmp.eq.s32.totalorder %s25, 0
      %s28 = sadd.s32 %s27, 1
      %s29 = scalar_select %p26, %s27, %s28
      %p32 = pneg %p26
      %p33 = scmp.eq.s32.totalorder %s17, 1
      %p34 = por %p32, %p33
      %p35 = scmp.ne.s32.totalorder %s27, %s30
      %p36 = scmp.eq.s32.totalorder %s17, 0
      %p37 = por %p35, %p36
      %p38 = scmp.ne.s32.totalorder %s27, %s30
      %p39 = scmp.eq.s32.totalorder %s22, 1
      %p40 = por %p38, %p39
      %p41 = scmp.ne.s32.totalorder %s30, %s31
      %p42 = scmp.eq.s32.totalorder %s22, 0
      %p43 = por %p41, %p42
      %p44 = scmp.ne.s32.totalorder %s30, %s31
      %p45 = scmp.eq.s32.totalorder %s23, 1
      %p46 = por %p44, %p45
      %p48 = scmp.ne.s32.totalorder %s31, %s47
      %p49 = scmp.eq.s32.totalorder %s23, 0
      %p50 = por %p48, %p49
      %s52 = sadd.s32 %s51, 1
      %p55 = scmp.eq.s32.totalorder %s17, 1
      %p56 = scmp.ne.s32.totalorder %s51, %s53
      %p57 = scmp.eq.s32.totalorder %s17, 0
      %p58 = por %p56, %p57
      %p59 = scmp.ne.s32.totalorder %s51, %s53
      %p60 = scmp.eq.s32.totalorder %s22, 1
      %p61 = por %p59, %p60
      %p62 = scmp.ne.s32.totalorder %s53, %s54
      %p63 = scmp.eq.s32.totalorder %s22, 0
      %p64 = por %p62, %p63
      %p65 = scmp.ne.s32.totalorder %s53, %s54
      %p66 = scmp.eq.s32.totalorder %s23, 1
      %p67 = por %p65, %p66
      %p69 = scmp.ne.s32.totalorder %s54, %s68
      %p70 = scmp.eq.s32.totalorder %s23, 0
      %p71 = por %p69, %p70
      %s73 = sadd.s32 %s72, 1
      %p76 = scmp.eq.s32.totalorder %s17, 1
      %p77 = scmp.ne.s32.totalorder %s72, %s74
      %p78 = scmp.eq.s32.totalorder %s17, 0
      %p79 = por %p77, %p78
      %p80 = scmp.ne.s32.totalorder %s72, %s74
      %p81 = scmp.eq.s32.totalorder %s22, 1
      %p82 = por %p80, %p81
      %p83 = scmp.ne.s32.totalorder %s74, %s75
      %p84 = scmp.eq.s32.totalorder %s22, 0
      %p85 = por %p83, %p84
      %p86 = scmp.ne.s32.totalorder %s74, %s75
      %p87 = scmp.eq.s32.totalorder %s23, 1
      %p88 = por %p86, %p87
      %p90 = scmp.ne.s32.totalorder %s75, %s89
      %p91 = scmp.eq.s32.totalorder %s23, 0
      %p92 = por %p90, %p91
      %s94 = sadd.s32 %s93, 1
      %p97 = scmp.eq.s32.totalorder %s17, 1
      %p98 = scmp.ne.s32.totalorder %s93, %s95
      %p99 = scmp.eq.s32.totalorder %s17, 0
      %p100 = por %p98, %p99
      %p101 = scmp.ne.s32.totalorder %s93, %s95
      %p102 = scmp.eq.s32.totalorder %s22, 1
      %p103 = por %p101, %p102
      %p104 = scmp.ne.s32.totalorder %s95, %s96
      %p105 = scmp.eq.s32.totalorder %s22, 0
      %p106 = por %p104, %p105
      %p107 = scmp.ne.s32.totalorder %s95, %s96
      %p108 = scmp.eq.s32.totalorder %s23, 1
      %p109 = por %p107, %p108
      %p111 = scmp.ne.s32.totalorder %s96, %s110
      %p112 = scmp.eq.s32.totalorder %s23, 0
      %p113 = por %p111, %p112
      %s115 = sadd.s32 %s114, 1
      %p118 = scmp.eq.s32.totalorder %s17, 1
      %p119 = scmp.ne.s32.totalorder %s114, %s116
      %p120 = scmp.eq.s32.totalorder %s17, 0
      %p121 = por %p119, %p120
      %p122 = scmp.ne.s32.totalorder %s114, %s116
      %p123 = scmp.eq.s32.totalorder %s22, 1
      %p124 = por %p122, %p123
      %p125 = scmp.ne.s32.totalorder %s116, %s117
      %p126 = scmp.eq.s32.totalorder %s22, 0
      %p127 = por %p125, %p126
      %p128 = scmp.ne.s32.totalorder %s116, %s117
      %p129 = scmp.eq.s32.totalorder %s23, 1
      %p130 = por %p128, %p129
      %p132 = scmp.ne.s32.totalorder %s117, %s131
      %p133 = scmp.eq.s32.totalorder %s23, 0
      %p134 = por %p132, %p133
      %s136 = sadd.s32 %s135, 1
      %p139 = scmp.eq.s32.totalorder %s17, 1
      %p140 = scmp.ne.s32.totalorder %s135, %s137
      %p141 = scmp.eq.s32.totalorder %s17, 0
      %p142 = por %p140, %p141
      %p143 = scmp.ne.s32.totalorder %s135, %s137
      %p144 = scmp.eq.s32.totalorder %s22, 1
      %p145 = por %p143, %p144
      %p146 = scmp.ne.s32.totalorder %s137, %s138
      %p147 = scmp.eq.s32.totalorder %s22, 0
      %p148 = por %p146, %p147
      %p149 = scmp.ne.s32.totalorder %s137, %s138
      %p150 = scmp.eq.s32.totalorder %s23, 1
      %p151 = por %p149, %p150
      %p153 = scmp.ne.s32.totalorder %s138, %s152
      %p154 = scmp.eq.s32.totalorder %s23, 0
      %p155 = por %p153, %p154
      %s157 = sadd.s32 %s156, 1
      %p160 = scmp.eq.s32.totalorder %s17, 1
      %p161 = scmp.ne.s32.totalorder %s156, %s158
      %p162 = scmp.eq.s32.totalorder %s17, 0
      %p163 = por %p161, %p162
      %p164 = scmp.ne.s32.totalorder %s156, %s158
      %p165 = scmp.eq.s32.totalorder %s22, 1
      %p166 = por %p164, %p165
      %p167 = scmp.ne.s32.totalorder %s158, %s159
      %p168 = scmp.eq.s32.totalorder %s22, 0
      %p169 = por %p167, %p168
      %p170 = scmp.ne.s32.totalorder %s158, %s159
      %p171 = scmp.eq.s32.totalorder %s23, 1
      %p172 = por %p170, %p171
      %p174 = scmp.ne.s32.totalorder %s159, %s173
      %p175 = scmp.eq.s32.totalorder %s23, 0
      %p176 = por %p174, %p175
      %s177 = ssub.s32 %s17, %s24
      %p178 = scmp.eq.s32.totalorder %s177, 0
      %s180 = sadd.s32 %s179, 1
      %s181 = scalar_select %p178, %s179, %s180
      %p184 = pneg %p178
      %p185 = scmp.eq.s32.totalorder %s17, 1
      %p186 = por %p184, %p185
      %p187 = scmp.ne.s32.totalorder %s179, %s182
      %p188 = scmp.eq.s32.totalorder %s17, 0
      %p189 = por %p187, %p188
      %p190 = scmp.ne.s32.totalorder %s179, %s182
      %p191 = scmp.eq.s32.totalorder %s22, 1
      %p192 = por %p190, %p191
      %p193 = scmp.ne.s32.totalorder %s182, %s183
      %p194 = scmp.eq.s32.totalorder %s22, 0
      %p195 = por %p193, %p194
      %p196 = scmp.ne.s32.totalorder %s182, %s183
      %p197 = scmp.eq.s32.totalorder %s23, 1
      %p198 = por %p196, %p197
      %p200 = scmp.ne.s32.totalorder %s183, %s199
      %p201 = scmp.eq.s32.totalorder %s23, 0
      %p202 = por %p200, %p201
      %p203 = scmp.le.s32.totalorder 1, %s17
      %p204 = scmp.lt.s32.totalorder %s17, 3
      %p205 = pnand %p203, %p204
      %p206 = pneg %p205
      // Predicated region
      $region9: #{tpu_custom_call.1} parent=5 // pred_check
        _
      $region10: #{tpu_custom_call.1} parent=5 // pred_check_branch
        %208 = sbr.rel (%p205) target = $region12
      $region11: #{tpu_custom_call.1} parent=5 // pred_region
        %s209 = ssub.s32 %s17, 1
        // Predicated region
        $region13: #{tpu_custom_call.1} parent=11 // pred_check
          %p210 = pneg %p64
        $region14: #{tpu_custom_call.1} parent=11 // pred_check_branch
          %212 = sbr.rel (%p210) target = $region16
        $region15: #{tpu_custom_call.1} parent=11 // pred_region
          _
        $region16: #{tpu_custom_call.1} parent=11 // pred_fallthru
          _
        // Predicated region
        $region17: #{tpu_custom_call.1} parent=11 // pred_check
          %p213 = pneg %p85
        $region18: #{tpu_custom_call.1} parent=11 // pred_check_branch
          %215 = sbr.rel (%p213) target = $region20
        $region19: #{tpu_custom_call.1} parent=11 // pred_region
          _
        $region20: #{tpu_custom_call.1} parent=11 // pred_fallthru
          _
        // Predicated region
        $region21: #{tpu_custom_call.1} parent=11 // pred_check
          %p216 = pneg %p106
        $region22: #{tpu_custom_call.1} parent=11 // pred_check_branch
          %218 = sbr.rel (%p216) target = $region24
        $region23: #{tpu_custom_call.1} parent=11 // pred_region
          _
        $region24: #{tpu_custom_call.1} parent=11 // pred_fallthru
          _
        // Predicated region
        $region25: #{tpu_custom_call.1} parent=11 // pred_check
          %p219 = pneg %p127
        $region26: #{tpu_custom_call.1} parent=11 // pred_check_branch
          %221 = sbr.rel (%p219) target = $region28
        $region27: #{tpu_custom_call.1} parent=11 // pred_region
          _
        $region28: #{tpu_custom_call.1} parent=11 // pred_fallthru
          _
        // Predicated region
        $region29: #{tpu_custom_call.1} parent=11 // pred_check
          %p222 = pneg %p148
        $region30: #{tpu_custom_call.1} parent=11 // pred_check_branch
          %224 = sbr.rel (%p222) target = $region32
        $region31: #{tpu_custom_call.1} parent=11 // pred_region
          %s226 = ssub.s32 1024, 1024
          %227 = vsyncadd [#allocation3], %s226
          %s228 = sshll.u32 [#allocation2], 4
          %s229 = int_to_ptr.vmem [resolvable:$true] %s228
          %234 = dma.hbm_to_vmem [thread:$0]  %s5, 1024, %s229, [#allocation3], 64, 64, 4
        $region32: #{tpu_custom_call.1} parent=11 // pred_fallthru
          _
        // Predicated region
        $region33: #{tpu_custom_call.1} parent=11 // pred_check
          %p235 = pneg %p169
        $region34: #{tpu_custom_call.1} parent=11 // pred_check_branch
          %237 = sbr.rel (%p235) target = $region36
        $region35: #{tpu_custom_call.1} parent=11 // pred_region
          _
        $region36: #{tpu_custom_call.1} parent=11 // pred_fallthru
          _
      $region12: #{tpu_custom_call.1} parent=5 // pred_fallthru
        _
      %p238 = scmp.lt.s32.totalorder %s17, 2
      // Predicated region
      $region37: #{tpu_custom_call.1} parent=5 // pred_check
        %p239 = pneg %p238
      $region38: #{tpu_custom_call.1} parent=5 // pred_check_branch
        %241 = sbr.rel (%p239) target = $region40
      $region39: #{tpu_custom_call.1} parent=5 // pred_region
        // Predicated region
        $region41: #{tpu_custom_call.1} parent=39 // pred_check
          %p242 = pneg %p37
        $region42: #{tpu_custom_call.1} parent=39 // pred_check_branch
          %244 = sbr.rel (%p242) target = $region44
        $region43: #{tpu_custom_call.1} parent=39 // pred_region
          %s245 = smul.u32 2, %s17
          %p246 = scmp.lt.s32.totalorder %s245, 3
          %s247 = scalar_select %p246, %s245, 3
          %s248 = smul.addr %s247, 8
          %s249 = scalar_lea.vmem %s0, %s248
          %s250 = smul.u32 2, %s17
        $region44: #{tpu_custom_call.1} parent=39 // pred_fallthru
          _
      $region40: #{tpu_custom_call.1} parent=5 // pred_fallthru
        _
      %p251 = scmp.le.s32.totalorder 1, %s17
      %p252 = scmp.lt.s32.totalorder %s17, 3
      %p253 = pnand %p251, %p252
      %p254 = pneg %p253
      // Predicated region
      $region45: #{tpu_custom_call.1} parent=5 // pred_check
        _
      $region46: #{tpu_custom_call.1} parent=5 // pred_check_branch
        %256 = sbr.rel (%p253) target = $region48
      $region47: #{tpu_custom_call.1} parent=5 // pred_region
        %s257 = ssub.s32 %s17, 1
        // Predicated region
        $region49: #{tpu_custom_call.1} parent=47 // pred_check
          %p258 = pneg %p148
        $region50: #{tpu_custom_call.1} parent=47 // pred_check_branch
          %260 = sbr.rel (%p258) target = $region52
        $region51: #{tpu_custom_call.1} parent=47 // pred_region
          %261 = dma.done [#allocation3], 1024
        $region52: #{tpu_custom_call.1} parent=47 // pred_fallthru
          _
        %s262 = smul.u32 2, %s22
        %p263 = scmp.lt.s32.totalorder %s262, 3
        %s264 = scalar_select %p263, %s262, 3
        %s265 = smul.addr %s264, 8
        %s266 = scalar_lea.vmem %s0, %s265
        %p267 = pneg %p43
        %p268 = pneg %p40
        %p269 = pneg %p64
        %p270 = pneg %p61
        %p271 = pneg %p85
        %p272 = pneg %p82
        %p273 = pneg %p106
        %p274 = pneg %p103
        %p275 = pneg %p127
        %p276 = pneg %p124
        %p277 = pneg %p148
        %p278 = pneg %p145
        %p279 = pneg %p169
        %p280 = pneg %p166
        %p281 = pneg %p195
        %p282 = pneg %p192
        %s283 = sand.u32 %s182, 1
        %s284 = scalar_lea.sflag [#allocation4], %s283
        %s285 = sand.u32 %s182, 1
        %s286 = smul.addr %s285, 8
        %s287 = scalar_lea.vmem [#allocation5], %s286
        %s288 = smul.u32 2, %s22
        %p289 = scmp.lt.s32.totalorder %s288, 3
        %s290 = scalar_select %p289, %s288, 3
        %s291 = smul.addr %s290, 8
        %s292 = scalar_lea.vmem %s0, %s291
        %s293 = smul.u32 2, %s22
        %s294 = smul.u32 2, %s22
        %v296 = vld [vmem:[%s292] sm:$0xff]
        %v297 = vld [vmem:[%s292 + $0x8] sm:$0xff]
        %v298 = vpack.c.bf16 %v297, %v296
        %v299 = vld [vmem:[%s1] sm:$0x7]
        %v300 = vld [vmem:[%s2] sm:$0x1]
        %v302 = vlaneseq
        %v303 = vshrl.u32 %v302, 7
        %v304 = vsub.s32 0, %v303
        %v305 = vrot.slane %v300, %v304
        %vm307 = vcmask 48128
        %v309 = vsel %vm307, %v298, 0
        %vm311 = vcmask 1042432
        %v313 = vsel %vm311, %v299, 0
        %315 = vmatprep.subr.bf16.mxu0 0
        %316 = vmatpush1.bf16.msra.mxu0 0
        %317 = vmatprep.subr.bf16.mxu0 0
        %318 = vmatpush1.bf16.msra.mxu0 0
        %319 = vmatprep.subr.bf16.mxu0 0
        %320 = vmatpush1.bf16.msra.mxu0 0
        %321 = vmatprep.subr.bf16.mxu0 0
        %322 = vmatpush1.bf16.msra.mxu0 0
        %323 = vmatprep.subr.bf16.mxu0 0
        %324 = vmatpush1.bf16.msra.mxu0 0
        %325 = vmatprep.subr.bf16.mxu0 0
        %326 = vmatpush1.bf16.msra.mxu0 0
        %327 = vmatprep.subr.bf16.mxu0 0
        %328 = vmatpush1.bf16.msra.mxu0 0
        %329 = vmatprep.subr.bf16.mxu0 0
        %330 = vmatpush1.bf16.msra.mxu0 %v313
        %331 = vmatprep.subr.bf16.mxu0 0
        %332 = vmatpush2.bf16.msra.mxu0 0
        %333 = vmatprep.subr.bf16.mxu0 0
        %334 = vmatpush2.bf16.msra.mxu0 0
        %335 = vmatprep.subr.bf16.mxu0 0
        %336 = vmatpush2.bf16.msra.mxu0 0
        %337 = vmatprep.subr.bf16.mxu0 0
        %338 = vmatpush2.bf16.msra.mxu0 0
        %339 = vmatprep.subr.bf16.mxu0 0
        %340 = vmatpush2.bf16.msra.mxu0 0
        %341 = vmatprep.subr.bf16.mxu0 0
        %342 = vmatpush2.bf16.msra.mxu0 0
        %343 = vmatprep.subr.bf16.mxu0 0
        %344 = vmatpush2.bf16.msra.mxu0 0
        %345 = vmatprep.subr.bf16.mxu0 0
        %346 = vmatpush2.bf16.msra.mxu0 0
        %347 = vmatprep.mubr.bf16.mxu0 0
        %348 = vmatmul.mubr.bf16.gmra.mxu0 %v309
        %v349 = vpop.f32.mrf.mxu0
        %v350 = vadd.f32 %v305, %v349
        %v351 = vpop.f32.mrf.mxu0
        %v352 = vpop.f32.mrf.mxu0
        %v353 = vadd.f32 %v305, %v352
        %v354 = vpop.f32.mrf.mxu0
        %355 = vdwg.mxu0
        %356 = vadd.xlane.f32.xlu0 %v350
        %v357 = vpop.xlane.xlu0 %356
        %358 = vadd.xlane.f32.xlu0 %v353
        %v359 = vpop.xlane.xlu0 %358
        %v360 = vrcp.pop 128.0
        %v361 = vmul.f32 %v357, %v360
        %v362 = vmul.f32 %v359, %v360
        %v363 = vsub.f32 %v350, %v361
        %v364 = vsub.f32 %v353, %v362
        %v365 = vmul.f32 %v363, %v363
        %v366 = vmul.f32 %v364, %v364
        %367 = vadd.xlane.f32.xlu0 %v365
        %v368 = vpop.xlane.xlu0 %367
        %369 = vadd.xlane.f32.xlu0 %v366
        %v370 = vpop.xlane.xlu0 %369
        %v371 = vmul.f32 %v368, %v360
        %v372 = vmul.f32 %v370, %v360
        %v373 = vadd.f32 %v371, 1e-06
        %v374 = vadd.f32 %v372, 1e-06
        %v375 = vrsqrt.pop %v373
        %v376 = vrsqrt.pop %v374
        %v377 = vmul.f32 %v363, %v375
        %v378 = vmul.f32 %v364, %v376
        %v379 = vld [vmem:[%s3] sm:$0x1]
        %v381 = vlaneseq
        %v382 = vshrl.u32 %v381, 7
        %v383 = vsub.s32 0, %v382
        %v384 = vrot.slane %v379, %v383
        %v386 = vmul.f32 %v377, %v384
        %v387 = vmul.f32 %v378, %v384
        %v388 = vld [vmem:[%s4] sm:$0x1]
        %v390 = vlaneseq
        %v391 = vshrl.u32 %v390, 7
        %v392 = vsub.s32 0, %v391
        %v393 = vrot.slane %v388, %v392
        %v395 = vadd.f32 %v386, %v393
        %v396 = vadd.f32 %v387, %v393
        %v397 = vpack.c.bf16 %v396, %v395
        %v398 = vld [vmem:[#allocation2] sm:$0xf]
        %v399 = vld [vmem:[#allocation2 + $0x4] sm:$0xf]
        %v400 = vld [vmem:[#allocation2 + $0x8] sm:$0xf]
        %v401 = vld [vmem:[#allocation2 + $0xc] sm:$0xf]
        %v402 = vld [vmem:[#allocation2 + $0x10] sm:$0xf]
        %v403 = vld [vmem:[#allocation2 + $0x14] sm:$0xf]
        %v404 = vld [vmem:[#allocation2 + $0x18] sm:$0xf]
        %v405 = vld [vmem:[#allocation2 + $0x1c] sm:$0xf]
        %v406 = vld [vmem:[#allocation2 + $0x20] sm:$0xf]
        %v407 = vld [vmem:[#allocation2 + $0x24] sm:$0xf]
        %v408 = vld [vmem:[#allocation2 + $0x28] sm:$0xf]
        %v409 = vld [vmem:[#allocation2 + $0x2c] sm:$0xf]
        %v410 = vld [vmem:[#allocation2 + $0x30] sm:$0xf]
        %v411 = vld [vmem:[#allocation2 + $0x34] sm:$0xf]
        %v412 = vld [vmem:[#allocation2 + $0x38] sm:$0xf]
        %v413 = vld [vmem:[#allocation2 + $0x3c] sm:$0xf]
        %v414 = vld [vmem:[%s6] sm:$0x1]
        %v416 = vlaneseq
        %v417 = vshrl.u32 %v416, 7
        %v418 = vsub.s32 0, %v417
        %v419 = vrot.slane %v414, %v418
        %v437 = vunpack.c.l.b16 %v398
        %v438 = vunpack.c.l.b16 %v399
        %v439 = vunpack.c.l.b16 %v400
        %v440 = vunpack.c.l.b16 %v401
        %v441 = vunpack.c.l.b16 %v402
        %v442 = vunpack.c.l.b16 %v403
        %v443 = vunpack.c.l.b16 %v404
        %v444 = vunpack.c.l.b16 %v405
        %v445 = vunpack.c.l.b16 %v406
        %v446 = vunpack.c.l.b16 %v407
        %v447 = vunpack.c.l.b16 %v408
        %v448 = vunpack.c.l.b16 %v409
        %v449 = vunpack.c.l.b16 %v410
        %v450 = vunpack.c.l.b16 %v411
        %v451 = vunpack.c.l.b16 %v412
        %v452 = vunpack.c.l.b16 %v413
        %v453 = vpack.c.b16 %v438, %v437
        %v454 = vpack.c.b16 %v440, %v439
        %v455 = vpack.c.b16 %v442, %v441
        %v456 = vpack.c.b16 %v444, %v443
        %v457 = vpack.c.b16 %v446, %v445
        %v458 = vpack.c.b16 %v448, %v447
        %v459 = vpack.c.b16 %v450, %v449
        %v460 = vpack.c.b16 %v452, %v451
        %469 = vmatprep.subr.bf16.mxu0 0
        %470 = vmatpush1.bf16.msra.mxu0 %v460
        %471 = vmatprep.subr.bf16.mxu0 0
        %472 = vmatpush1.bf16.msra.mxu0 %v459
        %473 = vmatprep.subr.bf16.mxu0 0
        %474 = vmatpush1.bf16.msra.mxu0 %v458
        %475 = vmatprep.subr.bf16.mxu0 0
        %476 = vmatpush1.bf16.msra.mxu0 %v457
        %477 = vmatprep.subr.bf16.mxu0 0
        %478 = vmatpush1.bf16.msra.mxu0 %v456
        %479 = vmatprep.subr.bf16.mxu0 0
        %480 = vmatpush1.bf16.msra.mxu0 %v455
        %481 = vmatprep.subr.bf16.mxu0 0
        %482 = vmatpush1.bf16.msra.mxu0 %v454
        %483 = vmatprep.subr.bf16.mxu0 0
        %484 = vmatpush1.bf16.msra.mxu0 %v453
        %485 = vmatprep.subr.bf16.mxu0 0
        %486 = vmatpush2.bf16.msra.mxu0 0
        %487 = vmatprep.subr.bf16.mxu0 0
        %488 = vmatpush2.bf16.msra.mxu0 0
        %489 = vmatprep.subr.bf16.mxu0 0
        %490 = vmatpush2.bf16.msra.mxu0 0
        %491 = vmatprep.subr.bf16.mxu0 0
        %492 = vmatpush2.bf16.msra.mxu0 0
        %493 = vmatprep.subr.bf16.mxu0 0
        %494 = vmatpush2.bf16.msra.mxu0 0
        %495 = vmatprep.subr.bf16.mxu0 0
        %496 = vmatpush2.bf16.msra.mxu0 0
        %497 = vmatprep.subr.bf16.mxu0 0
        %498 = vmatpush2.bf16.msra.mxu0 0
        %499 = vmatprep.subr.bf16.mxu0 0
        %500 = vmatpush2.bf16.msra.mxu0 0
        %501 = vmatprep.mubr.bf16.mxu0 0
        %502 = vmatmul.mubr.bf16.gmra.mxu0 %v397
        %v503 = vpop.f32.mrf.mxu0
        %v504 = vadd.f32 %v419, %v503
        %v505 = vpop.f32.mrf.mxu0
        %v506 = vpop.f32.mrf.mxu0
        %v507 = vadd.f32 %v419, %v506
        %v508 = vpop.f32.mrf.mxu0
        %509 = vdwg.mxu0
        %v510 = vpack.c.bf16 %v507, %v504
        %v512 = vunpack.c.l.b16 %v510
        %v513 = vunpack.c.h.b16 %v510
        %v514 = vpack.c.b16 %v512, %v512
        %v515 = vpack.c.b16 %v513, %v513
        %518 = vst [vmem:[%s287] sm:$0xf] %v514
        %519 = vst [vmem:[%s287 + $0x4] sm:$0xf] %v515
        %s520 = sand.u32 %s182, 1
        %s521 = scalar_lea.sflag [#allocation4], %s520
        %s522 = sand.u32 %s182, 1
        %s523 = smul.addr %s522, 8
        %s524 = scalar_lea.vmem [#allocation5], %s523
        // Predicated region
        $region53: #{tpu_custom_call.1} parent=47 // pred_check
          %p525 = pneg %p192
        $region54: #{tpu_custom_call.1} parent=47 // pred_check_branch
          %527 = sbr.rel (%p525) target = $region56
        $region55: #{tpu_custom_call.1} parent=47 // pred_region
          %s528 = smul.u32 2, %s22
          %s530 = ssub.s32 128, 128
          %531 = vsyncadd %s521, %s530
          %s532 = smul.addr %s528, 64
          %s533 = scalar_lea.hbm %s7, %s532
          %s534 = sshll.u32 %s524, 4
          %s535 = int_to_ptr.vmem [resolvable:$true] %s534
          %540 = dma.vmem_to_hbm [thread:$0]  %s535, 128, %s533, %s521, 64, 64, 4
        $region56: #{tpu_custom_call.1} parent=47 // pred_fallthru
          _
      $region48: #{tpu_custom_call.1} parent=5 // pred_fallthru
        _
      %p541 = scmp.le.s32.totalorder 2, %s17
      // Predicated region
      $region57: #{tpu_custom_call.1} parent=5 // pred_check
        %p542 = pneg %p541
      $region58: #{tpu_custom_call.1} parent=5 // pred_check_branch
        %544 = sbr.rel (%p542) target = $region60
      $region59: #{tpu_custom_call.1} parent=5 // pred_region
        %s545 = ssub.s32 %s17, 2
        // Predicated region
        $region61: #{tpu_custom_call.1} parent=59 // pred_check
          %p546 = pneg %p198
        $region62: #{tpu_custom_call.1} parent=59 // pred_check_branch
          %548 = sbr.rel (%p546) target = $region64
        $region63: #{tpu_custom_call.1} parent=59 // pred_region
          %s549 = sand.u32 %s183, 1
          %s550 = scalar_lea.sflag [#allocation4], %s549
          %s551 = sand.u32 %s183, 1
          %s552 = smul.addr %s551, 8
          %s553 = scalar_lea.vmem [#allocation5], %s552
          %554 = dma.done %s550, 128
        $region64: #{tpu_custom_call.1} parent=59 // pred_fallthru
          _
      $region60: #{tpu_custom_call.1} parent=5 // pred_fallthru
        _
    $region6: #{tpu_custom_call.1} parent=1 // loop_footer
      %s21 = sadd.s32 1, %s17
    $region7: #{tpu_custom_call.1} parent=1 // loop_footer_branch
      %16 = sbr.rel target = $region3
    $region8: #{tpu_custom_call.1} parent=1 // loop_exit
      _
    %555 = vsyncpa [#allocation3], 1
    %s556 = scalar_lea.sflag [#allocation3], 1
    %557 = vsyncpa %s556, 1
    %558 = vsyncpa [#allocation4], 1
    %s559 = scalar_lea.sflag [#allocation4], 1
    %560 = vsyncpa %s559, 1

</llo_original>
